<compile_context>
chip_gen: v5e
topology: v5e:2x2
jax: 0.10.0
libtpu: 0.0.40
codegen_flags: <defaults>
</compile_context>

<pallas_src>
import functools

import jax
import jax.numpy as jnp
from jax.experimental import pallas as pl
from jax.experimental.pallas import tpu as pltpu


def _quantizer_kernel(x_ref, scale_ref, inv_ref, zp_ref, o_ref, *, qmin, qmax):
    """Elementwise quantize -> round(half away from zero) -> clamp -> dequantize."""
    x = x_ref[...].astype(jnp.float32)                 # in-kernel upcast
    shape = x.shape
    # Hoist broadcasts once (JAX does not CSE broadcast_in_dim).
    inv = jnp.broadcast_to(inv_ref[...], shape)        # 1/scale, precomputed in wrapper
    zp = jnp.broadcast_to(zp_ref[...], shape)

    q = x * inv + zp
    # Round half away from zero == torch sign(q)*floor(|q|+0.5), cheaper form:
    mag = jnp.floor(jnp.abs(q) + jnp.float32(0.5))
    r = jnp.where(q < jnp.float32(0.0), -mag, mag)
    r = jnp.clip(r, jnp.float32(qmin), jnp.float32(qmax))

    scale = jnp.broadcast_to(scale_ref[...], shape)
    o_ref[...] = ((r - zp) * scale).astype(o_ref.dtype)


def _round_up(v, m):
    return ((v + m - 1) // m) * m


def _choose_tiles(rows, cols, itemsize):
    """Pick (row_tile, col_tile) honoring the (8,128) rule and a VMEM budget."""
    budget = 4 * 1024 * 1024                      # bytes per x tile (~86% roofline @1024^2 f32)
    sub = max(8, 32 // max(itemsize, 1))          # packed-sublane granularity: f32 8, bf16 16, i8 32

    if cols % 128 == 0:
        max_ct = max(128, (budget // (sub * itemsize)) // 128 * 128)
        ct = min(cols, max_ct)
    else:
        # Non-128-multiple lane dim must stay full-extent (BlockSpec rule).
        # TODO(synk): pad/split strategy for extremely wide non-128-multiple cols.
        ct = cols

    rt = (budget // max(ct * itemsize, 1)) // sub * sub
    rt = max(sub, rt)

    if rt >= rows:
        if cols <= ct and rows >= 2 * sub:
            # Keep >=2 blocks on a parallel axis so v7x's two TensorCores both
            # get work and the DMA pipeline double-buffers.
            rt = _round_up((rows + 1) // 2, sub)
        else:
            rt = rows                              # full-extent rows (always legal)
    return rt, ct


def _quantize_2d(x2d, scale2d, inv2d, zp2d, qmin, qmax):
    """x2d: (rows, cols). scale/inv/zp: (rows,1) per-row, (1,cols) per-lane, or (1,1)."""
    rows, cols = x2d.shape
    itemsize = x2d.dtype.itemsize
    rt, ct = _choose_tiles(rows, cols, itemsize)

    if scale2d.shape == (1, 1):                    # scalar scale / zero_point
        s_spec = pl.BlockSpec((1, 1), lambda i, j: (0, 0))
    elif scale2d.shape[1] == 1:                    # per-row params (layout A)
        s_spec = pl.BlockSpec((rt, 1), lambda i, j: (i, 0))
    else:                                          # per-lane params (layout B)
        s_spec = pl.BlockSpec((1, ct), lambda i, j: (0, j))

    # VMEM estimate: double-buffered in/out windows + a few f32 temporaries.
    in_tile = rt * ct * itemsize
    f32_tile = rt * ct * 4
    est = 4 * in_tile + 5 * f32_tile
    vmem_limit = None
    if est > 28 * 1024 * 1024:
        vmem_limit = int(min(max(est, 32 * 1024 * 1024), 56 * 1024 * 1024))

    kernel = functools.partial(_quantizer_kernel, qmin=qmin, qmax=qmax)
    return pl.pallas_call(
        kernel,
        out_shape=jax.ShapeDtypeStruct((rows, cols), x2d.dtype),
        grid_spec=pltpu.PrefetchScalarGridSpec(
            num_scalar_prefetch=0,
            grid=(pl.cdiv(rows, rt), pl.cdiv(cols, ct)),
            in_specs=[
                pl.BlockSpec((rt, ct), lambda i, j: (i, j)),
                s_spec,
                s_spec,
                s_spec,
            ],
            out_specs=pl.BlockSpec((rt, ct), lambda i, j: (i, j)),
        ),
        compiler_params=pltpu.CompilerParams(
            dimension_semantics=("parallel", "parallel"),
            vmem_limit_bytes=vmem_limit),
    )(x2d, scale2d, inv2d, zp2d)


def _flatten_lane_dense(x):
    """Lane-dense 2-D view for the scalar-scale case."""
    numel = x.size
    if numel % 128 == 0:
        rows, cols = numel // 128, 128
        # Widen lanes while keeping >=8 sublane rows for dense vregs.
        while cols < 4096 and rows % 2 == 0 and rows > 8:
            rows //= 2
            cols *= 2
        return x.reshape(rows, cols)
    return x.reshape(x.shape[0], -1)


class QuantizerPallas:
    """JAX/Pallas equivalent of Quantizer.forward (eval mode)."""

    def __init__(self, bits, out_channels, sign=True, scale=None, zero_point=None):
        self.bits = bits
        self.sign = sign
        self.out_channels = out_channels
        if out_channels == -1:
            # buffers registered as shape (1,) in the PyTorch module
            self.scale = (jnp.ones((1,), jnp.float32) if scale is None
                          else jnp.asarray(scale, jnp.float32))
            self.zero_point = (jnp.zeros((1,), jnp.float32) if zero_point is None
                               else jnp.asarray(zero_point, jnp.float32))
        else:
            # buffers registered as shape (C, 1, 1, 1) in the PyTorch module
            self.scale = (jnp.ones((out_channels, 1, 1, 1), jnp.float32)
                          if scale is None else jnp.asarray(scale, jnp.float32))
            self.zero_point = (jnp.zeros((out_channels, 1, 1, 1), jnp.float32)
                               if zero_point is None
                               else jnp.asarray(zero_point, jnp.float32))

    def __call__(self, x):
        if self.bits == 32:
            return x
        assert self.bits != 1, "Binary quantization is not supported"
        # TODO(synk): training-mode range_tracker(input) / update_params() is
        # stateful calibration logic outside the kernel hot path; only the
        # eval-mode forward is implemented here.

        if self.sign:
            qmin, qmax = -(1 << (self.bits - 1)), (1 << (self.bits - 1)) - 1
        else:
            qmin, qmax = 0, (1 << self.bits) - 1

        orig_shape = x.shape
        if self.out_channels == -1:
            x2d = _flatten_lane_dense(x)
            scale2d = self.scale.reshape(1, 1)
            zp2d = self.zero_point.reshape(1, 1)
            inv2d = 1.0 / scale2d
        else:
            assert x.ndim == 4, "per-channel Quantizer expects NCHW input"
            N, C, H, W = x.shape
            hw = H * W
            sc = self.scale.reshape(C)
            zp = self.zero_point.reshape(C)
            inv = 1.0 / sc                 # precomputed once; no per-tile divide
            if hw % 128 == 0:
                # Layout A: rows = N*C, lane-dense cols = H*W; per-row params.
                x2d = x.reshape(N * C, hw)
                scale2d = jnp.broadcast_to(sc[None, :], (N, C)).reshape(N * C, 1)
                inv2d = jnp.broadcast_to(inv[None, :], (N, C)).reshape(N * C, 1)
                zp2d = jnp.broadcast_to(zp[None, :], (N, C)).reshape(N * C, 1)
            else:
                # Layout B: rows = N, lane-dense cols = C*H*W; per-lane params.
                # Avoids masked vst on non-128-multiple feature maps (7x7 etc).
                x2d = x.reshape(N, C * hw)
                scale2d = jnp.broadcast_to(sc[:, None], (C, hw)).reshape(1, C * hw)
                inv2d = jnp.broadcast_to(inv[:, None], (C, hw)).reshape(1, C * hw)
                zp2d = jnp.broadcast_to(zp[:, None], (C, hw)).reshape(1, C * hw)

        y2d = _quantize_2d(x2d,
                           scale2d.astype(jnp.float32),
                           inv2d.astype(jnp.float32),
                           zp2d.astype(jnp.float32),
                           qmin, qmax)
        return y2d.reshape(orig_shape)


def _reference(x, scale, zp, bits, sign):
    # Plain-JAX reference of the PyTorch forward.  Uses the algebraically
    # identical x * (1/scale) form so the comparison with the kernel is exact;
    # the PyTorch divide can differ by 1 ulp pre-rounding, visible only for
    # values landing exactly on a .5 rounding boundary.
    if sign:
        qmin, qmax = -(1 << (bits - 1)), (1 << (bits - 1)) - 1
    else:
        qmin, qmax = 0, (1 << bits) - 1
    q = x * (1.0 / scale) + zp
    mag = jnp.floor(jnp.abs(q) + 0.5)
    r = jnp.where(q < 0, -mag, mag)
    r = jnp.clip(r, qmin, qmax)
    return (r - zp) * scale


if __name__ == "__main__":
    key = jax.random.PRNGKey(0)
    kx, ks, kz, kx2, kx3 = jax.random.split(key, 5)

    # --- Test 1: per-channel signed, H*W % 128 == 0 (layout A) ------------
    N, C, H, W = 2, 4, 16, 16
    bits = 8
    x = jax.random.normal(kx, (N, C, H, W), jnp.float32) * 3.0
    scale = 0.05 + 0.1 * jax.random.uniform(ks, (C, 1, 1, 1), jnp.float32)
    zero_point = jnp.round(
        jax.random.uniform(kz, (C, 1, 1, 1), jnp.float32) * 4.0 - 2.0)

    quant = QuantizerPallas(bits=bits, out_channels=C, sign=True,
                            scale=scale, zero_point=zero_point)
    y = jax.block_until_ready(quant(x))
    y_ref = _reference(x, scale.reshape(1, C, 1, 1),
                       zero_point.reshape(1, C, 1, 1), bits, True)
    assert y.shape == x.shape and y.dtype == x.dtype
    assert jnp.allclose(y, y_ref, atol=1e-5, rtol=1e-5), "layout-A mismatch"

    # --- Test 2: per-channel signed, H*W % 128 != 0 (layout B, lane-dense) -
    x7 = jax.random.normal(kx2, (2, 4, 7, 7), jnp.float32) * 3.0
    y7 = jax.block_until_ready(quant(x7))
    y7_ref = _reference(x7, scale.reshape(1, C, 1, 1),
                        zero_point.reshape(1, C, 1, 1), bits, True)
    assert y7.shape == x7.shape and y7.dtype == x7.dtype
    assert jnp.allclose(y7, y7_ref, atol=1e-5, rtol=1e-5), "layout-B mismatch"

    # --- Test 3: per-channel, multi-block grid (rows split across 2 blocks) -
    C3 = 8
    x3 = jax.random.normal(kx3, (2, C3, 32, 32), jnp.float32) * 3.0
    scale3 = 0.05 + 0.1 * jax.random.uniform(ks, (C3, 1, 1, 1), jnp.float32)
    zp3 = jnp.round(jax.random.uniform(kz, (C3, 1, 1, 1), jnp.float32) * 4.0 - 2.0)
    quant3 = QuantizerPallas(bits=bits, out_channels=C3, sign=True,
                             scale=scale3, zero_point=zp3)
    y3 = jax.block_until_ready(quant3(x3))
    y3_ref = _reference(x3, scale3.reshape(1, C3, 1, 1),
                        zp3.reshape(1, C3, 1, 1), bits, True)
    assert jnp.allclose(y3, y3_ref, atol=1e-5, rtol=1e-5), "multi-block mismatch"

    # --- Test 4: scalar-scale (out_channels == -1), unsigned 4-bit ---------
    s0 = jnp.array([0.07], jnp.float32)
    z0 = jnp.array([3.0], jnp.float32)
    quant_s = QuantizerPallas(bits=4, out_channels=-1, sign=False,
                              scale=s0, zero_point=z0)
    y_s = jax.block_until_ready(quant_s(x))
    y_s_ref = _reference(x, s0.reshape(1, 1, 1, 1), z0.reshape(1, 1, 1, 1),
                         4, False)
    assert y_s.shape == x.shape and y_s.dtype == x.dtype
    assert jnp.allclose(y_s, y_s_ref, atol=1e-5, rtol=1e-5), "scalar mismatch"

    print("KERNEL_OK")
</pallas_src>

<mosaic_0001>
module attributes {stable_mosaic.version = 11 : i64} {
  func.func @_quantizer_kernel(%arg0: i32, %arg1: i32, %arg2: memref<8x256xf32, #tpu.memory_space<vmem>>, %arg3: memref<8x1xf32, #tpu.memory_space<vmem>>, %arg4: memref<8x1xf32, #tpu.memory_space<vmem>>, %arg5: memref<8x1xf32, #tpu.memory_space<vmem>>, %arg6: memref<8x256xf32, #tpu.memory_space<vmem>>) attributes {dimension_semantics = [#tpu.dimension_semantics<parallel>, #tpu.dimension_semantics<parallel>], iteration_bounds = array<i64: 1, 1>, scalar_prefetch = 0 : i64, scratch_operands = 0 : i64, tpu.core_type = #tpu.core_type<tc>, window_params = [{transform_indices = @transform_0, window_bounds = array<i64: 8, 256>}, {transform_indices = @transform_1, window_bounds = array<i64: 8, 1>}, {transform_indices = @transform_2, window_bounds = array<i64: 8, 1>}, {transform_indices = @transform_3, window_bounds = array<i64: 8, 1>}, {transform_indices = @transform_4, window_bounds = array<i64: 8, 256>}]} {
    %c0 = arith.constant 0 : index
    %c0_0 = arith.constant 0 : index
    %0 = vector.load %arg2[%c0, %c0_0] : memref<8x256xf32, #tpu.memory_space<vmem>>, vector<8x256xf32>
    %c0_1 = arith.constant 0 : index
    %c0_2 = arith.constant 0 : index
    %1 = vector.load %arg4[%c0_1, %c0_2] : memref<8x1xf32, #tpu.memory_space<vmem>>, vector<8x1xf32>
    %2 = vector.shape_cast %1 : vector<8x1xf32> to vector<8x1xf32>
    %3 = vector.broadcast %2 : vector<8x1xf32> to vector<8x256xf32>
    %c0_3 = arith.constant 0 : index
    %c0_4 = arith.constant 0 : index
    %4 = vector.load %arg5[%c0_3, %c0_4] : memref<8x1xf32, #tpu.memory_space<vmem>>, vector<8x1xf32>
    %5 = vector.shape_cast %4 : vector<8x1xf32> to vector<8x1xf32>
    %6 = vector.broadcast %5 : vector<8x1xf32> to vector<8x256xf32>
    %7 = arith.mulf %0, %3 : vector<8x256xf32>
    %8 = arith.addf %7, %6 : vector<8x256xf32>
    %9 = math.absf %8 : vector<8x256xf32>
    %cst = arith.constant 5.000000e-01 : f32
    %10 = vector.broadcast %cst : f32 to vector<8x256xf32>
    %11 = arith.addf %9, %10 : vector<8x256xf32>
    %12 = math.floor %11 : vector<8x256xf32>
    %cst_5 = arith.constant 0.000000e+00 : f32
    %13 = vector.broadcast %cst_5 : f32 to vector<8x256xf32>
    %14 = arith.cmpf olt, %8, %13 : vector<8x256xf32>
    %cst_6 = arith.constant 0.000000e+00 : f32
    %15 = vector.broadcast %cst_6 : f32 to vector<8x256xf32>
    %16 = arith.subf %15, %12 : vector<8x256xf32>
    %17 = arith.select %14, %16, %12 : vector<8x256xi1>, vector<8x256xf32>
    %cst_7 = arith.constant -1.280000e+02 : f32
    %cst_8 = arith.constant 1.270000e+02 : f32
    %18 = vector.broadcast %cst_7 : f32 to vector<8x256xf32>
    %19 = arith.maximumf %18, %17 : vector<8x256xf32>
    %20 = vector.broadcast %cst_8 : f32 to vector<8x256xf32>
    %21 = arith.minimumf %20, %19 : vector<8x256xf32>
    %c0_9 = arith.constant 0 : index
    %c0_10 = arith.constant 0 : index
    %22 = vector.load %arg3[%c0_9, %c0_10] : memref<8x1xf32, #tpu.memory_space<vmem>>, vector<8x1xf32>
    %23 = vector.shape_cast %22 : vector<8x1xf32> to vector<8x1xf32>
    %24 = vector.broadcast %23 : vector<8x1xf32> to vector<8x256xf32>
    %25 = arith.subf %21, %6 : vector<8x256xf32>
    %26 = arith.mulf %25, %24 : vector<8x256xf32>
    %c0_11 = arith.constant 0 : index
    %c0_12 = arith.constant 0 : index
    %27 = vector.load %arg6[%c0_11, %c0_12] : memref<8x256xf32, #tpu.memory_space<vmem>>, vector<8x256xf32>
    tpu.vector_store %arg6[%c0_11, %c0_12], %26 {strides = array<i32>} : memref<8x256xf32, #tpu.memory_space<vmem>>, vector<8x256xf32>,
    return
  }
  func.func @transform_0(%arg0: i32, %arg1: i32) -> (i32, i32) {
    %c0_i32 = arith.constant 0 : i32
    return %arg0, %arg1 : i32, i32
  }
  func.func @transform_1(%arg0: i32, %arg1: i32) -> (i32, i32) {
    %c0_i32 = arith.constant 0 : i32
    %c0_i32_0 = arith.constant 0 : i32
    return %arg0, %c0_i32 : i32, i32
  }
  func.func @transform_2(%arg0: i32, %arg1: i32) -> (i32, i32) {
    %c0_i32 = arith.constant 0 : i32
    %c0_i32_0 = arith.constant 0 : i32
    return %arg0, %c0_i32 : i32, i32
  }
  func.func @transform_3(%arg0: i32, %arg1: i32) -> (i32, i32) {
    %c0_i32 = arith.constant 0 : i32
    %c0_i32_0 = arith.constant 0 : i32
    return %arg0, %c0_i32 : i32, i32
  }
  func.func @transform_4(%arg0: i32, %arg1: i32) -> (i32, i32) {
    %c0_i32 = arith.constant 0 : i32
    return %arg0, %arg1 : i32, i32
  }
}

</mosaic_0001>

<llo_original>
// kernel: tpu_custom_call.1
$region0: #{tpu_custom_call.1}
  #allocation0 [shape = 'u32[]', space=smem, size = 0x4, offset = 0x4, fixed_abs, tag = 'smem constant byte address 0x4 - core index']
  #allocation1 [shape = 'u32[72,128]{1,0:T(1,128)}', space=vmem, size = 0x9000, scoped, tag = 'internal scratch']
  %s0 = inlined_call_operand.vmem [shape: f32[8,256], index: 0, kind: input, shape index: {}]
  %s1 = inlined_call_operand.vmem [shape: f32[8,1], index: 1, kind: input, shape index: {}]
  %s2 = inlined_call_operand.vmem [shape: f32[8,1], index: 2, kind: input, shape index: {}]
  %s3 = inlined_call_operand.vmem [shape: f32[8,1], index: 3, kind: input, shape index: {}]
  %s4 = inlined_call_operand.hbm [shape: f32[8,256], index: 4, kind: output, shape index: {}]
  %s5 = sld [smem:[#allocation0]]
  $region26: #{tpu_custom_call.1} parent=0
    _
  %s7 = ssub.s32 1, %s5
  %s8 = scalar_select 0, %s7, %s5
  $region1: #{tpu_custom_call.1} parent=0
    #allocation2 [shape = 'u8[8192]{0}', space=vmem, size = 0x2000, scoped, tag = 'output window, operand 0, single buffered']
    #allocation3 [shape = 's32[1]{0}', space=sflag, size = 0x4, scoped, tag = 'scoped memory for tpu_custom_call.1']
    %9 = vsyncpa [#allocation3], 0
    // Predicated region
    $region2: #{tpu_custom_call.1} parent=1 // pred_check
      _
    $region3: #{tpu_custom_call.1} parent=1 // pred_check_branch
      %11 = sbr.rel (0) target = $region5
    $region4: #{tpu_custom_call.1} parent=1 // pred_region
      _
    $region5: #{tpu_custom_call.1} parent=1 // pred_fallthru
      _
    // Predicated region
    $region6: #{tpu_custom_call.1} parent=1 // pred_check
      _
    $region7: #{tpu_custom_call.1} parent=1 // pred_check_branch
      %13 = sbr.rel (0) target = $region9
    $region8: #{tpu_custom_call.1} parent=1 // pred_region
      _
    $region9: #{tpu_custom_call.1} parent=1 // pred_fallthru
      _
    // Predicated region
    $region10: #{tpu_custom_call.1} parent=1 // pred_check
      _
    $region11: #{tpu_custom_call.1} parent=1 // pred_check_branch
      %15 = sbr.rel (0) target = $region13
    $region12: #{tpu_custom_call.1} parent=1 // pred_region
      _
    $region13: #{tpu_custom_call.1} parent=1 // pred_fallthru
      _
    // Predicated region
    $region14: #{tpu_custom_call.1} parent=1 // pred_check
      _
    $region15: #{tpu_custom_call.1} parent=1 // pred_check_branch
      %17 = sbr.rel (0) target = $region17
    $region16: #{tpu_custom_call.1} parent=1 // pred_region
      _
    $region17: #{tpu_custom_call.1} parent=1 // pred_fallthru
      _
    %v18 = vld [vmem:[%s0] sm:$0xff]
    %v19 = vld [vmem:[%s0 + $0x8] sm:$0xff]
    %v20 = vld [vmem:[%s2] sm:$0xff]
    %22 = vset.pattern.permute.xlu0 0
    %23 = vperm.xlu0 %22, %v20
    %v24 = vpop.permute.xlu0 %23
    %v26 = vld [vmem:[%s3] sm:$0xff]
    %28 = vset.pattern.permute.xlu0 0
    %29 = vperm.xlu0 %28, %v26
    %v30 = vpop.permute.xlu0 %29
    %v32 = vmul.f32 %v18, %v24
    %v33 = vmul.f32 %v19, %v24
    %v34 = vadd.f32 %v32, %v30
    %v35 = vadd.f32 %v33, %v30
    %v36 = vand.u32 2147483647, %v34
    %v37 = vand.u32 2147483647, %v35
    %v38 = vadd.f32 %v36, 0.5
    %v39 = vadd.f32 %v37, 0.5
    %v40 = vfloor.f32 %v38
    %v41 = vfloor.f32 %v39
    %vm42 = vcmp.lt.f32.partialorder %v34, 0.0
    %vm43 = vcmp.lt.f32.partialorder %v35, 0.0
    %v44 = vsub.f32 0.0, %v40
    %v45 = vsub.f32 0.0, %v41
    %v46 = vsel %vm42, %v44, %v40
    %v47 = vsel %vm43, %v45, %v41
    %v48 = vmax.f32 %v46, -128.0
    %v49 = vmax.f32 %v47, -128.0
    %v50 = vmin.f32 %v48, 127.0
    %v51 = vmin.f32 %v49, 127.0
    %v52 = vld [vmem:[%s1] sm:$0xff]
    %54 = vset.pattern.permute.xlu0 0
    %55 = vperm.xlu0 %54, %v52
    %v56 = vpop.permute.xlu0 %55
    %v58 = vsub.f32 %v50, %v30
    %v59 = vsub.f32 %v51, %v30
    %v60 = vmul.f32 %v58, %v56
    %v61 = vmul.f32 %v59, %v56
    %62 = vst [vmem:[#allocation2] sm:$0xff] %v60
    %63 = vst [vmem:[#allocation2 + $0x8] sm:$0xff] %v61
    // Predicated region
    $region18: #{tpu_custom_call.1} parent=1 // pred_check
      _
    $region19: #{tpu_custom_call.1} parent=1 // pred_check_branch
      %65 = sbr.rel (0) target = $region21
    $region20: #{tpu_custom_call.1} parent=1 // pred_region
      %67 = vsyncadd [#allocation3], 0
      %s69 = sshll.u32 [#allocation2], 4
      %s70 = int_to_ptr.vmem [resolvable:$true] %s69
      %s71 = sshll.u32 %s4, 4
      %s72 = int_to_ptr.hbm [resolvable:$true] %s71
      %74 = dma.vmem_to_hbm [thread:$0]  %s70, 256, %s72, [#allocation3]
    $region21: #{tpu_custom_call.1} parent=1 // pred_fallthru
      _
    // Predicated region
    $region22: #{tpu_custom_call.1} parent=1 // pred_check
      _
    $region23: #{tpu_custom_call.1} parent=1 // pred_check_branch
      %76 = sbr.rel (0) target = $region25
    $region24: #{tpu_custom_call.1} parent=1 // pred_region
      %78 = dma.done [#allocation3], 256
    $region25: #{tpu_custom_call.1} parent=1 // pred_fallthru
      _
    %79 = vsyncpa [#allocation3], 1

</llo_original>
